<compile_context>
chip_gen: v5e
topology: v5e:2x2
jax: 0.10.0
libtpu: 0.0.40
codegen_flags: <defaults>
</compile_context>

<pallas_src>
from functools import partial

import numpy as np
import jax
import jax.numpy as jnp
from jax.experimental import pallas as pl
from jax.experimental.pallas import tpu as pltpu


def _round_up(a, b):
    return ((a + b - 1) // b) * b


def _kps_loss_kernel(x_ref, label_ref, samp_ref, s_list_ref, m_list_ref,
                     tlp_ref, *, n_valid, block_rows):
    i = pl.program_id(0)

    x = x_ref[...].astype(jnp.float32)   # (TN, C) upcast in-kernel (bf16-safe)
    labels = label_ref[...]              # (TN, 1) int32
    samp = samp_ref[...]                 # (TN, 1) f32 per-sample scale
    s_list = s_list_ref[...]             # (1, C)  f32 per-class scale
    m_list = m_list_ref[...]             # (1, C)  f32 per-class margin

    cosine = x * s_list
    # one-hot(label) via iota compare (replaces torch scatter_)
    col_ids = jax.lax.broadcasted_iota(jnp.int32, cosine.shape, 1)
    onehot = col_ids == labels                                   # (TN, C)
    out = jnp.where(onehot, cosine - m_list, cosine) * samp      # (TN, C)

    # cross entropy: only target logit + LSE are needed per row.
    m = jnp.max(out, axis=-1, keepdims=True)
    z = out - m
    lse = jnp.log(jnp.sum(jnp.exp(z), axis=-1, keepdims=True))
    tgt_z = jnp.sum(jnp.where(onehot, z, 0.0), axis=-1, keepdims=True)
    tgt_lp = tgt_z - lse                                         # (TN, 1)

    # zero any rows past the true batch (garbage rows of a partial last block;
    # their writes are dropped anyway, this just keeps the values defined).
    row_ids = jax.lax.broadcasted_iota(jnp.int32, tgt_lp.shape, 0) + i * block_rows
    tlp_ref[...] = jnp.where(row_ids < n_valid, tgt_lp, 0.0)


def make_kps_params(cls_num_list, max_m=0.5, s=30.0, weighted=False):
    """Deterministic parameter construction mirroring KPSLoss.__init__."""
    s_list = np.asarray(cls_num_list, dtype=np.float32)
    s_list = s_list * (50.0 / s_list.min())
    s_list = np.log(s_list)
    s_list = s_list * (1.0 / s_list.min())
    m_list = s_list[::-1].copy()
    m_list = m_list * (max_m / m_list.max())
    if weighted:
        batch_s = np.clip(s_list[::-1] * s, s, 50.0).astype(np.float32)
    else:
        batch_s = np.full_like(s_list, s, dtype=np.float32)
    return (jnp.asarray(s_list)[None, :],
            jnp.asarray(m_list)[None, :],
            jnp.asarray(batch_s)[None, :])


def kps_loss(x, label, cls_num_list, max_m=0.5, s=30.0, weighted=False,
             block_rows=128):
    N, C = x.shape
    itemsize = x.dtype.itemsize
    s_list, m_list, scale_row = make_kps_params(cls_num_list, max_m, s, weighted)

    # --- batch tile sizing: double-buffered native-dtype tile + a few f32
    #     temporaries must stay comfortably under the scoped-VMEM limit. -----
    TN = min(int(block_rows), _round_up(N, 8))
    while TN > 8 and (2 * TN * C * itemsize + 4 * TN * C * 4) > 24 * 1024 * 1024:
        TN //= 2
    TN = max(8, (TN // 8) * 8)

    label2d = label.astype(jnp.int32).reshape(N, 1)
    # per-sample scale gathered in plain JAX (4N bytes) instead of N*C select
    samp = scale_row[0, label.astype(jnp.int32)].astype(jnp.float32).reshape(N, 1)

    grid = (pl.cdiv(N, TN),)
    cost = pl.CostEstimate(
        flops=10 * N * C,
        transcendentals=N * C,
        bytes_accessed=N * C * itemsize + N * 12 + 2 * C * 4,
    )

    tlp = pl.pallas_call(
        partial(_kps_loss_kernel, n_valid=N, block_rows=TN),
        out_shape=jax.ShapeDtypeStruct((N, 1), jnp.float32),
        grid=grid,
        in_specs=[
            pl.BlockSpec((TN, C), lambda i: (i, 0)),   # logits (native dtype)
            pl.BlockSpec((TN, 1), lambda i: (i, 0)),   # labels
            pl.BlockSpec((TN, 1), lambda i: (i, 0)),   # per-sample scale
            pl.BlockSpec((1, C), lambda i: (0, 0)),    # s_list (not re-DMA'd)
            pl.BlockSpec((1, C), lambda i: (0, 0)),    # m_list (not re-DMA'd)
        ],
        out_specs=pl.BlockSpec((TN, 1), lambda i: (i, 0)),
        compiler_params=pltpu.CompilerParams(
            dimension_semantics=("parallel",),
            vmem_limit_bytes=32 * 1024 * 1024,
        ),
        cost_estimate=cost,
    )(x, label2d, samp, s_list, m_list)

    # mean cross entropy over the TRUE batch size
    return -jnp.sum(tlp) / N


def _kps_loss_ref(x, label, cls_num_list, max_m=0.5, s=30.0, weighted=False):
    """Pure-JAX reference for validation."""
    s_list, m_list, scale_row = make_kps_params(cls_num_list, max_m, s, weighted)
    cosine = x.astype(jnp.float32) * s_list
    phi = cosine - m_list
    onehot = jax.nn.one_hot(label, x.shape[1], dtype=bool)
    out = jnp.where(onehot, phi, cosine)
    samp = jnp.sum(jnp.where(onehot, scale_row, 0.0), axis=-1, keepdims=True)
    out = out * samp
    logp = jax.nn.log_softmax(out, axis=-1)
    return -jnp.mean(jnp.sum(jnp.where(onehot, logp, 0.0), axis=-1))


if __name__ == "__main__":
    key = jax.random.PRNGKey(0)
    C = 16
    # long-tailed class counts, deterministic
    cls_num_list = (1000, 700, 500, 350, 250, 180, 130, 95, 70, 50, 36, 26,
                    19, 14, 10, 8)

    # one jitted entry point: gather + pallas_call + final reduction fuse into
    # a single dispatched XLA program.
    kps_jit = jax.jit(
        kps_loss,
        static_argnames=("cls_num_list", "max_m", "s", "weighted", "block_rows"),
    )

    # (batch, weighted) cases: multi-block grid, weighted branch, remainder rows
    for N, weighted in [(32, False), (32, True), (13, False)]:
        key, kx, kl = jax.random.split(key, 3)
        x = jax.random.normal(kx, (N, C), dtype=jnp.float32)
        label = jax.random.randint(kl, (N,), 0, C, dtype=jnp.int32)

        loss = kps_jit(x, label, cls_num_list, max_m=0.5, s=30.0,
                       weighted=weighted, block_rows=8)
        jax.block_until_ready(loss)
        ref = _kps_loss_ref(x, label, cls_num_list, max_m=0.5, s=30.0,
                            weighted=weighted)
        assert np.allclose(np.asarray(loss), np.asarray(ref),
                           atol=1e-4, rtol=1e-4), (N, weighted, loss, ref)

    print("KERNEL_OK")
</pallas_src>

<mosaic_0001>
module attributes {stable_mosaic.version = 11 : i64} {
  func.func @_kps_loss_kernel(%arg0: i32, %arg1: memref<8x16xf32, #tpu.memory_space<vmem>>, %arg2: memref<8x1xi32, #tpu.memory_space<vmem>>, %arg3: memref<8x1xf32, #tpu.memory_space<vmem>>, %arg4: memref<1x16xf32, #tpu.memory_space<vmem>>, %arg5: memref<1x16xf32, #tpu.memory_space<vmem>>, %arg6: memref<8x1xf32, #tpu.memory_space<vmem>>) attributes {dimension_semantics = [#tpu.dimension_semantics<parallel>], iteration_bounds = array<i64: 4>, scalar_prefetch = 0 : i64, scratch_operands = 0 : i64, tpu.core_type = #tpu.core_type<tc>, window_params = [{transform_indices = @transform_0, window_bounds = array<i64: 8, 16>}, {transform_indices = @transform_1, window_bounds = array<i64: 8, 1>}, {transform_indices = @transform_2, window_bounds = array<i64: 8, 1>}, {pipeline_mode = #tpu.pipeline_mode<synchronous>, transform_indices = @transform_3, window_bounds = array<i64: 1, 16>}, {pipeline_mode = #tpu.pipeline_mode<synchronous>, transform_indices = @transform_4, window_bounds = array<i64: 1, 16>}, {transform_indices = @transform_5, window_bounds = array<i64: 8, 1>}]} {
    %c0 = arith.constant 0 : index
    %c0_0 = arith.constant 0 : index
    %0 = vector.load %arg1[%c0, %c0_0] : memref<8x16xf32, #tpu.memory_space<vmem>>, vector<8x16xf32>
    %c0_1 = arith.constant 0 : index
    %c0_2 = arith.constant 0 : index
    %1 = vector.load %arg2[%c0_1, %c0_2] : memref<8x1xi32, #tpu.memory_space<vmem>>, vector<8x1xi32>
    %c0_3 = arith.constant 0 : index
    %c0_4 = arith.constant 0 : index
    %2 = vector.load %arg3[%c0_3, %c0_4] : memref<8x1xf32, #tpu.memory_space<vmem>>, vector<8x1xf32>
    %c0_5 = arith.constant 0 : index
    %c0_6 = arith.constant 0 : index
    %3 = vector.load %arg4[%c0_5, %c0_6] : memref<1x16xf32, #tpu.memory_space<vmem>>, vector<1x16xf32>
    %c0_7 = arith.constant 0 : index
    %c0_8 = arith.constant 0 : index
    %4 = vector.load %arg5[%c0_7, %c0_8] : memref<1x16xf32, #tpu.memory_space<vmem>>, vector<1x16xf32>
    %5 = vector.broadcast %3 : vector<1x16xf32> to vector<8x16xf32>
    %6 = arith.mulf %0, %5 : vector<8x16xf32>
    %7 = tpu.iota {dimensions = array<i32: 1>} : vector<8x16xi32>
    %8 = vector.broadcast %1 : vector<8x1xi32> to vector<8x16xi32>
    %9 = arith.cmpi eq, %7, %8 : vector<8x16xi32>
    %10 = vector.broadcast %4 : vector<1x16xf32> to vector<8x16xf32>
    %11 = arith.subf %6, %10 : vector<8x16xf32>
    %12 = arith.select %9, %11, %6 : vector<8x16xi1>, vector<8x16xf32>
    %13 = vector.broadcast %2 : vector<8x1xf32> to vector<8x16xf32>
    %14 = arith.mulf %12, %13 : vector<8x16xf32>
    %cst = arith.constant dense<0xFF800000> : vector<8xf32>
    %15 = vector.multi_reduction <maximumf>, %14, %cst [1] : vector<8x16xf32> to vector<8xf32>
    %16 = vector.shape_cast %15 : vector<8xf32> to vector<8x1xf32>
    %17 = vector.broadcast %16 : vector<8x1xf32> to vector<8x16xf32>
    %18 = arith.subf %14, %17 : vector<8x16xf32>
    %19 = math.exp %18 : vector<8x16xf32>
    %cst_9 = arith.constant dense<0.000000e+00> : vector<8xf32>
    %20 = vector.multi_reduction <add>, %19, %cst_9 [1] : vector<8x16xf32> to vector<8xf32>
    %21 = vector.shape_cast %20 : vector<8xf32> to vector<8x1xf32>
    %22 = math.log %21 : vector<8x1xf32>
    %cst_10 = arith.constant 0.000000e+00 : f32
    %23 = vector.broadcast %cst_10 : f32 to vector<8x16xf32>
    %24 = arith.select %9, %18, %23 : vector<8x16xi1>, vector<8x16xf32>
    %cst_11 = arith.constant dense<0.000000e+00> : vector<8xf32>
    %25 = vector.multi_reduction <add>, %24, %cst_11 [1] : vector<8x16xf32> to vector<8xf32>
    %26 = vector.shape_cast %25 : vector<8xf32> to vector<8x1xf32>
    %27 = arith.subf %26, %22 : vector<8x1xf32>
    %28 = tpu.iota {dimensions = array<i32: 0>} : vector<8x1xi32>
    %c8_i32 = arith.constant 8 : i32
    %29 = arith.muli %arg0, %c8_i32 : i32
    %30 = vector.broadcast %29 : i32 to vector<8x1xi32>
    %31 = arith.addi %28, %30 : vector<8x1xi32>
    %c32_i32 = arith.constant 32 : i32
    %32 = vector.broadcast %c32_i32 : i32 to vector<8x1xi32>
    %33 = arith.cmpi slt, %31, %32 : vector<8x1xi32>
    %cst_12 = arith.constant 0.000000e+00 : f32
    %34 = vector.broadcast %cst_12 : f32 to vector<8x1xf32>
    %35 = arith.select %33, %27, %34 : vector<8x1xi1>, vector<8x1xf32>
    %c0_13 = arith.constant 0 : index
    %c0_14 = arith.constant 0 : index
    %36 = vector.load %arg6[%c0_13, %c0_14] : memref<8x1xf32, #tpu.memory_space<vmem>>, vector<8x1xf32>
    tpu.vector_store %arg6[%c0_13, %c0_14], %35 {strides = array<i32>} : memref<8x1xf32, #tpu.memory_space<vmem>>, vector<8x1xf32>,
    return
  }
  func.func @transform_0(%arg0: i32) -> (i32, i32) {
    %c0_i32 = arith.constant 0 : i32
    %c0_i32_0 = arith.constant 0 : i32
    return %arg0, %c0_i32 : i32, i32
  }
  func.func @transform_1(%arg0: i32) -> (i32, i32) {
    %c0_i32 = arith.constant 0 : i32
    %c0_i32_0 = arith.constant 0 : i32
    return %arg0, %c0_i32 : i32, i32
  }
  func.func @transform_2(%arg0: i32) -> (i32, i32) {
    %c0_i32 = arith.constant 0 : i32
    %c0_i32_0 = arith.constant 0 : i32
    return %arg0, %c0_i32 : i32, i32
  }
  func.func @transform_3(%arg0: i32) -> (i32, i32) {
    %c0_i32 = arith.constant 0 : i32
    %c0_i32_0 = arith.constant 0 : i32
    %c0_i32_1 = arith.constant 0 : i32
    return %c0_i32, %c0_i32_0 : i32, i32
  }
  func.func @transform_4(%arg0: i32) -> (i32, i32) {
    %c0_i32 = arith.constant 0 : i32
    %c0_i32_0 = arith.constant 0 : i32
    %c0_i32_1 = arith.constant 0 : i32
    return %c0_i32, %c0_i32_0 : i32, i32
  }
  func.func @transform_5(%arg0: i32) -> (i32, i32) {
    %c0_i32 = arith.constant 0 : i32
    %c0_i32_0 = arith.constant 0 : i32
    return %arg0, %c0_i32 : i32, i32
  }
}

</mosaic_0001>

<llo_original>
// kernel: kps_loss.1
$region0: #{kps_loss.1}
  #allocation0 [shape = 'u32[]', space=smem, size = 0x4, offset = 0x4, fixed_abs, tag = 'smem constant byte address 0x4 - core index']
  #allocation1 [shape = 'u32[72,128]{1,0:T(1,128)}', space=vmem, size = 0x9000, scoped, tag = 'internal scratch']
  %s0 = inlined_call_operand.vmem [shape: f32[32,16], index: 0, kind: input, shape index: {}]
  %s1 = inlined_call_operand.vmem [shape: s32[32,1], index: 1, kind: input, shape index: {}]
  %s2 = inlined_call_operand.vmem [shape: f32[32,1], index: 2, kind: input, shape index: {}]
  %s3 = inlined_call_operand.vmem [shape: f32[1,16], index: 3, kind: input, shape index: {}]
  %s4 = inlined_call_operand.vmem [shape: f32[1,16], index: 4, kind: input, shape index: {}]
  %s5 = inlined_call_operand.vmem [shape: f32[32,1], index: 5, kind: output, shape index: {}]
  %s6 = sld [smem:[#allocation0]]
  $region53: #{kps_loss.1} parent=0
    _
  %s8 = ssub.s32 1, %s6
  %s9 = scalar_select 0, %s8, %s6
  loop: start=0, step=1, limit=6
  $region2: #{kps_loss.1} parent=0 // loop_pre_header
    _
  $region3: #{kps_loss.1} parent=0 // loop_header
    %s11 = sphi 0, %s15
    %p12 = scmp.ge.s32.totalorder %s11, 6
    %s21 = sphi 0, %s23
    %s24 = sphi 0, %s21
    %s25 = sphi 0, %s24
    %s41 = sphi 0, %s25
    %s47 = sphi 0, %s49
    %s50 = sphi 0, %s47
    %s51 = sphi 0, %s50
    %s67 = sphi 0, %s51
    %s73 = sphi 0, %s75
    %s76 = sphi 0, %s73
    %s77 = sphi 0, %s76
    %s93 = sphi 0, %s77
    %s97 = sphi 0, %s97
    %s99 = sphi 0, %s97
    %s100 = sphi 0, %s99
    %s114 = sphi 0, %s100
    %s118 = sphi 0, %s118
    %s120 = sphi 0, %s118
    %s121 = sphi 0, %s120
    %s135 = sphi 0, %s121
    %s141 = sphi 0, %s143
    %s144 = sphi 0, %s141
    %s145 = sphi 0, %s144
    %s161 = sphi 0, %s145
  $region4: #{kps_loss.1} parent=0 // loop_header_branch
    %14 = sbr.rel (%p12) target = $region8
  $region5: #{kps_loss.1} parent=0 // loop_body
    %s16 = ssub.s32 %s11, 1
    %s17 = ssub.s32 %s11, 2
    %s18 = sadd.s32 %s11, 1
    %s19 = ssub.s32 %s11, %s18
    %p20 = scmp.eq.s32.totalorder %s19, 0
    %s22 = sadd.s32 %s21, 1
    %s23 = scalar_select %p20, %s21, %s22
    %p26 = pneg %p20
    %p27 = scmp.eq.s32.totalorder %s11, 3
    %p28 = por %p26, %p27
    %p29 = scmp.ne.s32.totalorder %s21, %s24
    %p30 = scmp.eq.s32.totalorder %s11, 0
    %p31 = por %p29, %p30
    %p32 = scmp.ne.s32.totalorder %s21, %s24
    %p33 = scmp.eq.s32.totalorder %s16, 3
    %p34 = por %p32, %p33
    %p35 = scmp.ne.s32.totalorder %s24, %s25
    %p36 = scmp.eq.s32.totalorder %s16, 0
    %p37 = por %p35, %p36
    %p38 = scmp.ne.s32.totalorder %s24, %s25
    %p39 = scmp.eq.s32.totalorder %s17, 3
    %p40 = por %p38, %p39
    %p42 = scmp.ne.s32.totalorder %s25, %s41
    %p43 = scmp.eq.s32.totalorder %s17, 0
    %p44 = por %p42, %p43
    %s45 = ssub.s32 %s11, %s18
    %p46 = scmp.eq.s32.totalorder %s45, 0
    %s48 = sadd.s32 %s47, 1
    %s49 = scalar_select %p46, %s47, %s48
    %p52 = pneg %p46
    %p53 = scmp.eq.s32.totalorder %s11, 3
    %p54 = por %p52, %p53
    %p55 = scmp.ne.s32.totalorder %s47, %s50
    %p56 = scmp.eq.s32.totalorder %s11, 0
    %p57 = por %p55, %p56
    %p58 = scmp.ne.s32.totalorder %s47, %s50
    %p59 = scmp.eq.s32.totalorder %s16, 3
    %p60 = por %p58, %p59
    %p61 = scmp.ne.s32.totalorder %s50, %s51
    %p62 = scmp.eq.s32.totalorder %s16, 0
    %p63 = por %p61, %p62
    %p64 = scmp.ne.s32.totalorder %s50, %s51
    %p65 = scmp.eq.s32.totalorder %s17, 3
    %p66 = por %p64, %p65
    %p68 = scmp.ne.s32.totalorder %s51, %s67
    %p69 = scmp.eq.s32.totalorder %s17, 0
    %p70 = por %p68, %p69
    %s71 = ssub.s32 %s11, %s18
    %p72 = scmp.eq.s32.totalorder %s71, 0
    %s74 = sadd.s32 %s73, 1
    %s75 = scalar_select %p72, %s73, %s74
    %p78 = pneg %p72
    %p79 = scmp.eq.s32.totalorder %s11, 3
    %p80 = por %p78, %p79
    %p81 = scmp.ne.s32.totalorder %s73, %s76
    %p82 = scmp.eq.s32.totalorder %s11, 0
    %p83 = por %p81, %p82
    %p84 = scmp.ne.s32.totalorder %s73, %s76
    %p85 = scmp.eq.s32.totalorder %s16, 3
    %p86 = por %p84, %p85
    %p87 = scmp.ne.s32.totalorder %s76, %s77
    %p88 = scmp.eq.s32.totalorder %s16, 0
    %p89 = por %p87, %p88
    %p90 = scmp.ne.s32.totalorder %s76, %s77
    %p91 = scmp.eq.s32.totalorder %s17, 3
    %p92 = por %p90, %p91
    %p94 = scmp.ne.s32.totalorder %s77, %s93
    %p95 = scmp.eq.s32.totalorder %s17, 0
    %p96 = por %p94, %p95
    %s98 = sadd.s32 %s97, 1
    %p101 = scmp.eq.s32.totalorder %s11, 3
    %p102 = scmp.ne.s32.totalorder %s97, %s99
    %p103 = scmp.eq.s32.totalorder %s11, 0
    %p104 = por %p102, %p103
    %p105 = scmp.ne.s32.totalorder %s97, %s99
    %p106 = scmp.eq.s32.totalorder %s16, 3
    %p107 = por %p105, %p106
    %p108 = scmp.ne.s32.totalorder %s99, %s100
    %p109 = scmp.eq.s32.totalorder %s16, 0
    %p110 = por %p108, %p109
    %p111 = scmp.ne.s32.totalorder %s99, %s100
    %p112 = scmp.eq.s32.totalorder %s17, 3
    %p113 = por %p111, %p112
    %p115 = scmp.ne.s32.totalorder %s100, %s114
    %p116 = scmp.eq.s32.totalorder %s17, 0
    %p117 = por %p115, %p116
    %s119 = sadd.s32 %s118, 1
    %p122 = scmp.eq.s32.totalorder %s11, 3
    %p123 = scmp.ne.s32.totalorder %s118, %s120
    %p124 = scmp.eq.s32.totalorder %s11, 0
    %p125 = por %p123, %p124
    %p126 = scmp.ne.s32.totalorder %s118, %s120
    %p127 = scmp.eq.s32.totalorder %s16, 3
    %p128 = por %p126, %p127
    %p129 = scmp.ne.s32.totalorder %s120, %s121
    %p130 = scmp.eq.s32.totalorder %s16, 0
    %p131 = por %p129, %p130
    %p132 = scmp.ne.s32.totalorder %s120, %s121
    %p133 = scmp.eq.s32.totalorder %s17, 3
    %p134 = por %p132, %p133
    %p136 = scmp.ne.s32.totalorder %s121, %s135
    %p137 = scmp.eq.s32.totalorder %s17, 0
    %p138 = por %p136, %p137
    %s139 = ssub.s32 %s11, %s18
    %p140 = scmp.eq.s32.totalorder %s139, 0
    %s142 = sadd.s32 %s141, 1
    %s143 = scalar_select %p140, %s141, %s142
    %p146 = pneg %p140
    %p147 = scmp.eq.s32.totalorder %s11, 3
    %p148 = por %p146, %p147
    %p149 = scmp.ne.s32.totalorder %s141, %s144
    %p150 = scmp.eq.s32.totalorder %s11, 0
    %p151 = por %p149, %p150
    %p152 = scmp.ne.s32.totalorder %s141, %s144
    %p153 = scmp.eq.s32.totalorder %s16, 3
    %p154 = por %p152, %p153
    %p155 = scmp.ne.s32.totalorder %s144, %s145
    %p156 = scmp.eq.s32.totalorder %s16, 0
    %p157 = por %p155, %p156
    %p158 = scmp.ne.s32.totalorder %s144, %s145
    %p159 = scmp.eq.s32.totalorder %s17, 3
    %p160 = por %p158, %p159
    %p162 = scmp.ne.s32.totalorder %s145, %s161
    %p163 = scmp.eq.s32.totalorder %s17, 0
    %p164 = por %p162, %p163
    %p165 = scmp.le.s32.totalorder 1, %s11
    %p166 = scmp.lt.s32.totalorder %s11, 5
    %p167 = pnand %p165, %p166
    %p168 = pneg %p167
    // Predicated region
    $region9: #{kps_loss.1} parent=5 // pred_check
      _
    $region10: #{kps_loss.1} parent=5 // pred_check_branch
      %170 = sbr.rel (%p167) target = $region12
    $region11: #{kps_loss.1} parent=5 // pred_region
      %s171 = ssub.s32 %s11, 1
      // Predicated region
      $region13: #{kps_loss.1} parent=11 // pred_check
        %p172 = pneg %p110
      $region14: #{kps_loss.1} parent=11 // pred_check_branch
        %174 = sbr.rel (%p172) target = $region16
      $region15: #{kps_loss.1} parent=11 // pred_region
        _
      $region16: #{kps_loss.1} parent=11 // pred_fallthru
        _
      // Predicated region
      $region17: #{kps_loss.1} parent=11 // pred_check
        %p175 = pneg %p131
      $region18: #{kps_loss.1} parent=11 // pred_check_branch
        %177 = sbr.rel (%p175) target = $region20
      $region19: #{kps_loss.1} parent=11 // pred_region
        _
      $region20: #{kps_loss.1} parent=11 // pred_fallthru
        _
    $region12: #{kps_loss.1} parent=5 // pred_fallthru
      _
    %p178 = scmp.lt.s32.totalorder %s11, 4
    // Predicated region
    $region21: #{kps_loss.1} parent=5 // pred_check
      %p179 = pneg %p178
    $region22: #{kps_loss.1} parent=5 // pred_check_branch
      %181 = sbr.rel (%p179) target = $region24
    $region23: #{kps_loss.1} parent=5 // pred_region
      // Predicated region
      $region25: #{kps_loss.1} parent=23 // pred_check
        %p182 = pneg %p31
      $region26: #{kps_loss.1} parent=23 // pred_check_branch
        %184 = sbr.rel (%p182) target = $region28
      $region27: #{kps_loss.1} parent=23 // pred_region
        %p185 = scmp.lt.s32.totalorder %s11, 3
        %s186 = scalar_select %p185, %s11, 3
        %s187 = smul.addr %s186, 8
        %s188 = scalar_lea.vmem %s0, %s187
      $region28: #{kps_loss.1} parent=23 // pred_fallthru
        _
      // Predicated region
      $region29: #{kps_loss.1} parent=23 // pred_check
        %p189 = pneg %p57
      $region30: #{kps_loss.1} parent=23 // pred_check_branch
        %191 = sbr.rel (%p189) target = $region32
      $region31: #{kps_loss.1} parent=23 // pred_region
        %p192 = scmp.lt.s32.totalorder %s11, 3
        %s193 = scalar_select %p192, %s11, 3
        %s194 = smul.addr %s193, 8
        %s195 = scalar_lea.vmem %s1, %s194
      $region32: #{kps_loss.1} parent=23 // pred_fallthru
        _
      // Predicated region
      $region33: #{kps_loss.1} parent=23 // pred_check
        %p196 = pneg %p83
      $region34: #{kps_loss.1} parent=23 // pred_check_branch
        %198 = sbr.rel (%p196) target = $region36
      $region35: #{kps_loss.1} parent=23 // pred_region
        %p199 = scmp.lt.s32.totalorder %s11, 3
        %s200 = scalar_select %p199, %s11, 3
        %s201 = smul.addr %s200, 8
        %s202 = scalar_lea.vmem %s2, %s201
      $region36: #{kps_loss.1} parent=23 // pred_fallthru
        _
    $region24: #{kps_loss.1} parent=5 // pred_fallthru
      _
    %p203 = scmp.le.s32.totalorder 1, %s11
    %p204 = scmp.lt.s32.totalorder %s11, 5
    %p205 = pnand %p203, %p204
    %p206 = pneg %p205
    // Predicated region
    $region37: #{kps_loss.1} parent=5 // pred_check
      _
    $region38: #{kps_loss.1} parent=5 // pred_check_branch
      %208 = sbr.rel (%p205) target = $region40
    $region39: #{kps_loss.1} parent=5 // pred_region
      %s209 = ssub.s32 %s11, 1
      %p210 = scmp.lt.s32.totalorder %s16, 3
      %s211 = scalar_select %p210, %s16, 3
      %s212 = smul.addr %s211, 8
      %s213 = scalar_lea.vmem %s0, %s212
      %p214 = pneg %p37
      %p215 = pneg %p34
      %p216 = scmp.lt.s32.totalorder %s16, 3
      %s217 = scalar_select %p216, %s16, 3
      %s218 = smul.addr %s217, 8
      %s219 = scalar_lea.vmem %s1, %s218
      %p220 = pneg %p63
      %p221 = pneg %p60
      %p222 = scmp.lt.s32.totalorder %s16, 3
      %s223 = scalar_select %p222, %s16, 3
      %s224 = smul.addr %s223, 8
      %s225 = scalar_lea.vmem %s2, %s224
      %p226 = pneg %p89
      %p227 = pneg %p86
      %p228 = pneg %p110
      %p229 = pneg %p107
      %p230 = pneg %p131
      %p231 = pneg %p128
      %p232 = pneg %p157
      %p233 = pneg %p154
      %p234 = scmp.lt.s32.totalorder %s16, 3
      %s235 = scalar_select %p234, %s16, 3
      %s236 = smul.addr %s235, 8
      %s237 = scalar_lea.vmem %s5, %s236
      %p238 = scmp.lt.s32.totalorder %s16, 3
      %s239 = scalar_select %p238, %s16, 3
      %s240 = smul.addr %s239, 8
      %s241 = scalar_lea.vmem %s0, %s240
      %p242 = scmp.lt.s32.totalorder %s16, 3
      %s243 = scalar_select %p242, %s16, 3
      %s244 = smul.addr %s243, 8
      %s245 = scalar_lea.vmem %s1, %s244
      %p246 = scmp.lt.s32.totalorder %s16, 3
      %s247 = scalar_select %p246, %s16, 3
      %s248 = smul.addr %s247, 8
      %s249 = scalar_lea.vmem %s2, %s248
      %p250 = scmp.lt.s32.totalorder %s16, 3
      %s251 = scalar_select %p250, %s16, 3
      %s252 = smul.addr %s251, 8
      %s253 = scalar_lea.vmem %s5, %s252
      %v254 = vld [vmem:[%s241] sm:$0xff]
      %v255 = vld [vmem:[%s245] sm:$0xff]
      %v256 = vld [vmem:[%s249] sm:$0xff]
      %v257 = vld [vmem:[%s3] sm:$0x1]
      %v258 = vld [vmem:[%s4] sm:$0x1]
      %v260 = vperm.slane %v257, 0
      %v262 = vmul.f32 %v254, %v260
      %v263 = vlaneseq
      %v264 = vand.u32 %v263, 127
      %265 = vset.pattern.permute.xlu0 0
      %266 = vperm.xlu0 %265, %v255
      %v267 = vpop.permute.xlu0 %266
      %vm268 = vcmp.eq.s32.totalorder %v264, %v267
      %v270 = vperm.slane %v258, 0
      %v272 = vsub.f32 %v262, %v270
      %v273 = vsel %vm268, %v272, %v262
      %275 = vset.pattern.permute.xlu0 0
      %276 = vperm.xlu0 %275, %v256
      %v277 = vpop.permute.xlu0 %276
      %v279 = vmul.f32 %v273, %v277
      %vm280 = vcmask 130048
      %v281 = vsel %vm280, %v279, -inf
      %282 = vmax.xlane.f32.xlu0 %v281
      %v283 = vpop.xlane.xlu0 %282
      %v284 = vsub.f32 %v279, %v283
      %v285 = vmul.f32 %v284, 1.442695
      %v286 = vpow.pop %v285
      %v287 = vsel %vm280, %v286, 0.0
      %288 = vadd.xlane.f32.xlu0 %v287
      %v289 = vpop.xlane.xlu0 %288
      %v290 = vlog2.pop %v289
      %v291 = vmul.f32 %v290, 0.6931472
      %v292 = vsel %vm268, %v284, 0.0
      %v293 = vsel %vm280, %v292, 0.0
      %294 = vadd.xlane.f32.xlu0 %v293
      %v295 = vpop.xlane.xlu0 %294
      %v296 = vsub.f32 %v295, %v291
      %v297 = vlaneseq
      %v298 = vshrl.u32 %v297, 7
      %s299 = smul.u32 %s16, 8
      %v300 = vstv %s299
      %v301 = vadd.s32 %v298, %v300
      %vm302 = vcmp.lt.s32.totalorder %v301, 32
      %v303 = vsel %vm302, %v296, 0.0
      %vm304 = vcmask 7168
      %305 = vst.msk [vmem:[%s253] sm:$0xff] %vm304, %v303
      %p306 = scmp.lt.s32.totalorder %s16, 3
      %s307 = scalar_select %p306, %s16, 3
      %s308 = smul.addr %s307, 8
      %s309 = scalar_lea.vmem %s5, %s308
      // Predicated region
      $region41: #{kps_loss.1} parent=39 // pred_check
        %p310 = pneg %p154
      $region42: #{kps_loss.1} parent=39 // pred_check_branch
        %312 = sbr.rel (%p310) target = $region44
      $region43: #{kps_loss.1} parent=39 // pred_region
        _
      $region44: #{kps_loss.1} parent=39 // pred_fallthru
        _
    $region40: #{kps_loss.1} parent=5 // pred_fallthru
      _
    %p313 = scmp.le.s32.totalorder 2, %s11
    // Predicated region
    $region45: #{kps_loss.1} parent=5 // pred_check
      %p314 = pneg %p313
    $region46: #{kps_loss.1} parent=5 // pred_check_branch
      %316 = sbr.rel (%p314) target = $region48
    $region47: #{kps_loss.1} parent=5 // pred_region
      %s317 = ssub.s32 %s11, 2
      // Predicated region
      $region49: #{kps_loss.1} parent=47 // pred_check
        %p318 = pneg %p160
      $region50: #{kps_loss.1} parent=47 // pred_check_branch
        %320 = sbr.rel (%p318) target = $region52
      $region51: #{kps_loss.1} parent=47 // pred_region
        %p321 = scmp.lt.s32.totalorder %s17, 3
        %s322 = scalar_select %p321, %s17, 3
        %s323 = smul.addr %s322, 8
        %s324 = scalar_lea.vmem %s5, %s323
      $region52: #{kps_loss.1} parent=47 // pred_fallthru
        _
    $region48: #{kps_loss.1} parent=5 // pred_fallthru
      _
  $region6: #{kps_loss.1} parent=0 // loop_footer
    %s15 = sadd.s32 1, %s11
  $region7: #{kps_loss.1} parent=0 // loop_footer_branch
    %10 = sbr.rel target = $region3
  $region8: #{kps_loss.1} parent=0 // loop_exit
    _

</llo_original>
